<compile_context>
chip_gen: v6e
topology: v6e:2x2x1
jax: 0.10.0
libtpu: 0.0.40
codegen_flags: <defaults>
</compile_context>

<pallas_src>
import functools

import jax
import jax.numpy as jnp
from jax.experimental import pallas as pl
from jax.experimental.pallas import tpu as pltpu


# ---------------------------------------------------------------------------
# Fused kernel:  out = act( (g @ h) @ W^T + b )
#   grid = (N // tm, N // tk);  axis 0 = output row tiles (parallel),
#   axis 1 = reduction tiles over the aggregation dimension (arbitrary).
# ---------------------------------------------------------------------------
def _gcn_fused_kernel(g_ref, h_ref, w_ref, b_ref, out_ref, acc_ref, *, act):
    k = pl.program_id(1)

    @pl.when(k == 0)
    def _init():
        acc_ref[...] = jnp.zeros_like(acc_ref)

    # Aggregation partial product: (tm, tk) @ (tk, D) accumulated in f32 VMEM.
    acc_ref[...] += jnp.dot(
        g_ref[...], h_ref[...], preferred_element_type=jnp.float32
    )

    @pl.when(k == pl.num_programs(1) - 1)
    def _finalize():
        # Projection + bias + activation fused into the epilogue of the last
        # reduction step; (tm, D) @ (D, O) is a proper lane-dense MXU matmul.
        z = jnp.dot(acc_ref[...], w_ref[...], preferred_element_type=jnp.float32)
        z = z + b_ref[...]                       # (1, O) broadcast over rows
        out_ref[...] = act(z).astype(out_ref.dtype)


def _pick_tile(n, cap, multiple):
    """Largest t <= cap with n % t == 0 and t % multiple == 0; fallback: n."""
    best = None
    t = multiple
    limit = min(cap, n)
    while t <= limit:
        if n % t == 0:
            best = t
        t += multiple
    return best if best is not None else n


def gcn_forward(g, h, w_t, b, *, act=jax.nn.relu, tm=None, tk=None):
    """Fused GCN forward.  g: (N, N), h: (N, D), w_t: (D, O), b: (1, O)."""
    N, D = h.shape
    D_w, O = w_t.shape
    assert D_w == D and g.shape == (N, N) and b.shape == (1, O)

    # Row tile: multiple of 8 (sublane). Reduction tile: multiple of 128 (lane
    # of g) unless the whole axis is used.  Caps chosen to fit v7x VMEM too.
    if tm is None:
        tm = _pick_tile(N, 256, 8)
    if tk is None:
        tk = _pick_tile(N, 512, 128)
    assert N % tm == 0 and N % tk == 0

    grid = (N // tm, N // tk)
    kernel = functools.partial(_gcn_fused_kernel, act=act)

    return pl.pallas_call(
        kernel,
        out_shape=jax.ShapeDtypeStruct((N, O), h.dtype),
        grid_spec=pltpu.PrefetchScalarGridSpec(
            num_scalar_prefetch=0,
            grid=grid,
            in_specs=[
                pl.BlockSpec((tm, tk), lambda i, k: (i, k)),  # g row/red tile
                pl.BlockSpec((tk, D), lambda i, k: (k, 0)),   # h red tile, full feats
                pl.BlockSpec((D, O), lambda i, k: (0, 0)),    # W^T (resident)
                pl.BlockSpec((1, O), lambda i, k: (0, 0)),    # bias row (resident)
            ],
            out_specs=pl.BlockSpec((tm, O), lambda i, k: (i, 0)),
            scratch_shapes=[pltpu.VMEM((tm, D), jnp.float32)],
        ),
        compiler_params=pltpu.CompilerParams(
            dimension_semantics=("parallel", "arbitrary"),
        ),
    )(g, h, w_t, b)


# ---------------------------------------------------------------------------
# Pure-JAX reference (mirrors the PyTorch module exactly; drop == identity)
# ---------------------------------------------------------------------------
def gcn_reference(g, h, w_t, b, act=jax.nn.relu):
    # TODO(synk): nn.Dropout(p>0) has no in-kernel equivalent here; identity
    #             (inference mode) is assumed in both kernel and reference.
    z = (g @ h) @ w_t + b
    return act(z)


if __name__ == "__main__":
    key = jax.random.PRNGKey(0)
    k_g, k_h, k_w, k_b = jax.random.split(key, 4)

    # Small shapes consistent with the module: N nodes, in_dim -> out_dim.
    N, D, O = 256, 64, 64

    # Adjacency-like g: sparse 0/1 pattern with self-loops, row-normalized
    # (keeps magnitudes GCN-like and numerics well conditioned).
    g_raw = jax.random.uniform(k_g, (N, N), dtype=jnp.float32)
    g_bin = (g_raw > 0.9).astype(jnp.float32) + jnp.eye(N, dtype=jnp.float32)
    g_bin = jnp.minimum(g_bin, 1.0)
    deg = jnp.sum(g_bin, axis=-1, keepdims=True)
    g = g_bin / deg

    h = jax.random.normal(k_h, (N, D), dtype=jnp.float32)
    w_t = 0.1 * jax.random.normal(k_w, (D, O), dtype=jnp.float32)  # Linear weight^T
    b = 0.1 * jax.random.normal(k_b, (1, O), dtype=jnp.float32)    # Linear bias

    # Force a multi-step grid (2 x 2) so the tiled pipeline path is exercised.
    out = gcn_forward(g, h, w_t, b, act=jax.nn.relu, tm=128, tk=128)
    jax.block_until_ready(out)

    ref = gcn_reference(g, h, w_t, b, act=jax.nn.relu)
    assert out.shape == (N, O)
    assert jnp.allclose(out, ref, atol=1e-4, rtol=1e-4), "GCN output mismatch"

    print("KERNEL_OK")
</pallas_src>

<mosaic_0001>
module attributes {stable_mosaic.version = 11 : i64} {
  func.func @_gcn_fused_kernel(%arg0: i32, %arg1: i32, %arg2: memref<128x128xf32, #tpu.memory_space<vmem>>, %arg3: memref<128x64xf32, #tpu.memory_space<vmem>>, %arg4: memref<64x64xf32, #tpu.memory_space<vmem>>, %arg5: memref<1x64xf32, #tpu.memory_space<vmem>>, %arg6: memref<128x64xf32, #tpu.memory_space<vmem>>, %arg7: memref<128x64xf32, #tpu.memory_space<vmem>>) attributes {dimension_semantics = [#tpu.dimension_semantics<parallel>, #tpu.dimension_semantics<arbitrary>], iteration_bounds = array<i64: 2, 2>, scalar_prefetch = 0 : i64, scratch_operands = 1 : i64, tpu.core_type = #tpu.core_type<tc>, window_params = [{transform_indices = @transform_0, window_bounds = array<i64: 128, 128>}, {transform_indices = @transform_1, window_bounds = array<i64: 128, 64>}, {pipeline_mode = #tpu.pipeline_mode<synchronous>, transform_indices = @transform_2, window_bounds = array<i64: 64, 64>}, {pipeline_mode = #tpu.pipeline_mode<synchronous>, transform_indices = @transform_3, window_bounds = array<i64: 1, 64>}, {transform_indices = @transform_4, window_bounds = array<i64: 128, 64>}]} {
    %c0_i32 = arith.constant 0 : i32
    %0 = arith.cmpi eq, %arg1, %c0_i32 : i32
    %1 = arith.extui %0 : i1 to i32
    %c0_i32_0 = arith.constant 0 : i32
    %2 = arith.cmpi ne, %1, %c0_i32_0 : i32
    scf.if %2 {
      %cst_9 = arith.constant 0.000000e+00 : f32
      %12 = vector.broadcast %cst_9 : f32 to vector<128x64xf32>
      %c0_10 = arith.constant 0 : index
      %c0_11 = arith.constant 0 : index
      %13 = vector.load %arg7[%c0_10, %c0_11] : memref<128x64xf32, #tpu.memory_space<vmem>>, vector<128x64xf32>
      tpu.vector_store %arg7[%c0_10, %c0_11], %12 {strides = array<i32>} : memref<128x64xf32, #tpu.memory_space<vmem>>, vector<128x64xf32>,
    } else {
    }
    %c0 = arith.constant 0 : index
    %c0_1 = arith.constant 0 : index
    %3 = vector.load %arg7[%c0, %c0_1] : memref<128x64xf32, #tpu.memory_space<vmem>>, vector<128x64xf32>
    %c0_2 = arith.constant 0 : index
    %c0_3 = arith.constant 0 : index
    %4 = vector.load %arg2[%c0_2, %c0_3] : memref<128x128xf32, #tpu.memory_space<vmem>>, vector<128x128xf32>
    %c0_4 = arith.constant 0 : index
    %c0_5 = arith.constant 0 : index
    %5 = vector.load %arg3[%c0_4, %c0_5] : memref<128x64xf32, #tpu.memory_space<vmem>>, vector<128x64xf32>
    %cst = arith.constant dense<0.000000e+00> : vector<128x64xf32>
    %6 = tpu.matmul %4, %5, %cst {dimension_numbers = #tpu.dot_dimension_numbers<[1], [0], [0], [1], [0, 0, 1, 1], [], []>} : vector<128x128xf32>, vector<128x64xf32>, vector<128x64xf32> -> vector<128x64xf32>
    %7 = arith.addf %3, %6 : vector<128x64xf32>
    %c0_6 = arith.constant 0 : index
    %c0_7 = arith.constant 0 : index
    %8 = vector.load %arg7[%c0_6, %c0_7] : memref<128x64xf32, #tpu.memory_space<vmem>>, vector<128x64xf32>
    tpu.vector_store %arg7[%c0_6, %c0_7], %7 {strides = array<i32>} : memref<128x64xf32, #tpu.memory_space<vmem>>, vector<128x64xf32>,
    %c1_i32 = arith.constant 1 : i32
    %9 = arith.cmpi eq, %arg1, %c1_i32 : i32
    %10 = arith.extui %9 : i1 to i32
    %c0_i32_8 = arith.constant 0 : i32
    %11 = arith.cmpi ne, %10, %c0_i32_8 : i32
    scf.if %11 {
      %c0_9 = arith.constant 0 : index
      %c0_10 = arith.constant 0 : index
      %12 = vector.load %arg7[%c0_9, %c0_10] : memref<128x64xf32, #tpu.memory_space<vmem>>, vector<128x64xf32>
      %c0_11 = arith.constant 0 : index
      %c0_12 = arith.constant 0 : index
      %13 = vector.load %arg4[%c0_11, %c0_12] : memref<64x64xf32, #tpu.memory_space<vmem>>, vector<64x64xf32>
      %cst_13 = arith.constant dense<0.000000e+00> : vector<128x64xf32>
      %14 = tpu.matmul %12, %13, %cst_13 {dimension_numbers = #tpu.dot_dimension_numbers<[1], [0], [0], [1], [0, 0, 1, 1], [], []>} : vector<128x64xf32>, vector<64x64xf32>, vector<128x64xf32> -> vector<128x64xf32>
      %c0_14 = arith.constant 0 : index
      %c0_15 = arith.constant 0 : index
      %15 = vector.load %arg5[%c0_14, %c0_15] : memref<1x64xf32, #tpu.memory_space<vmem>>, vector<1x64xf32>
      %16 = vector.broadcast %15 : vector<1x64xf32> to vector<128x64xf32>
      %17 = arith.addf %14, %16 : vector<128x64xf32>
      %cst_16 = arith.constant 0.000000e+00 : f32
      %18 = vector.broadcast %cst_16 : f32 to vector<128x64xf32>
      %19 = arith.maximumf %17, %18 : vector<128x64xf32>
      %c0_17 = arith.constant 0 : index
      %c0_18 = arith.constant 0 : index
      %20 = vector.load %arg6[%c0_17, %c0_18] : memref<128x64xf32, #tpu.memory_space<vmem>>, vector<128x64xf32>
      tpu.vector_store %arg6[%c0_17, %c0_18], %19 {strides = array<i32>} : memref<128x64xf32, #tpu.memory_space<vmem>>, vector<128x64xf32>,
    } else {
    }
    return
  }
  func.func @transform_0(%arg0: i32, %arg1: i32) -> (i32, i32) {
    %c0_i32 = arith.constant 0 : i32
    return %arg0, %arg1 : i32, i32
  }
  func.func @transform_1(%arg0: i32, %arg1: i32) -> (i32, i32) {
    %c0_i32 = arith.constant 0 : i32
    %c0_i32_0 = arith.constant 0 : i32
    return %arg1, %c0_i32 : i32, i32
  }
  func.func @transform_2(%arg0: i32, %arg1: i32) -> (i32, i32) {
    %c0_i32 = arith.constant 0 : i32
    %c0_i32_0 = arith.constant 0 : i32
    %c0_i32_1 = arith.constant 0 : i32
    return %c0_i32, %c0_i32_0 : i32, i32
  }
  func.func @transform_3(%arg0: i32, %arg1: i32) -> (i32, i32) {
    %c0_i32 = arith.constant 0 : i32
    %c0_i32_0 = arith.constant 0 : i32
    %c0_i32_1 = arith.constant 0 : i32
    return %c0_i32, %c0_i32_0 : i32, i32
  }
  func.func @transform_4(%arg0: i32, %arg1: i32) -> (i32, i32) {
    %c0_i32 = arith.constant 0 : i32
    %c0_i32_0 = arith.constant 0 : i32
    return %arg0, %c0_i32 : i32, i32
  }
}

</mosaic_0001>

<llo_original>
// kernel: tpu_custom_call.1
$region0: #{tpu_custom_call.1}
  #allocation0 [shape = 'u32[]', space=smem, size = 0x4, offset = 0x4, fixed_abs, tag = 'smem constant byte address 0x4 - core index']
  #allocation1 [shape = 'u32[144,128]{1,0:T(1,128)}', space=vmem, size = 0x12000, scoped, tag = 'internal scratch']
  #allocation2 [shape = 'f32[128,64]{1,0:T(8,128)}', space=vmem, size = 0x10000, scoped, tag = 'scratch operand']
  %s0 = inlined_call_operand.hbm [shape: f32[256,256], index: 0, kind: input, shape index: {}]
  %s1 = inlined_call_operand.vmem [shape: f32[256,64], index: 1, kind: input, shape index: {}]
  %s2 = inlined_call_operand.vmem [shape: f32[64,64], index: 2, kind: input, shape index: {}]
  %s3 = inlined_call_operand.vmem [shape: f32[1,64], index: 3, kind: input, shape index: {}]
  %s4 = inlined_call_operand.vmem [shape: f32[256,64], index: 4, kind: output, shape index: {}]
  %s5 = sld [smem:[#allocation0]]
  $region61: #{tpu_custom_call.1} parent=0
    _
  %s7 = ssub.s32 1, %s5
  %s8 = scalar_select 0, %s7, %s5
  $region1: #{tpu_custom_call.1} parent=0
    #allocation3 [shape = 'u8[131072]{0}', space=vmem, size = 0x20000, scoped, tag = 'input window, operand 0']
    #allocation4 [shape = 's32[2]{0}', space=sflag, size = 0x8, scoped, tag = 'scoped memory for tpu_custom_call.1']
    %9 = vsyncpa [#allocation4], 0
    %s10 = scalar_lea.sflag [#allocation4], 1
    %11 = vsyncpa %s10, 0
    loop: start=0, step=1, limit=6
    $region2: #{tpu_custom_call.1} parent=1 // loop_pre_header
      _
    $region3: #{tpu_custom_call.1} parent=1 // loop_header
      %s13 = sphi 0, %s17
      %p14 = scmp.ge.s32.totalorder %s13, 6
      %s20 = sphi 0, %s32
      %s21 = sphi 0, %s28
      %s22 = sphi 0, %s20
      %s23 = sphi 0, %s21
      %s24 = sphi 0, %s22
      %s25 = sphi 0, %s23
      %s37 = sphi 0, %s39
      %s40 = sphi 0, %s37
      %s41 = sphi 0, %s40
      %s57 = sphi 0, %s41
      %s63 = sphi 0, %s65
      %s66 = sphi 0, %s63
      %s67 = sphi 0, %s66
      %s83 = sphi 0, %s67
      %s87 = sphi 0, %s87
      %s89 = sphi 0, %s87
      %s90 = sphi 0, %s89
      %s104 = sphi 0, %s90
      %s108 = sphi 0, %s108
      %s110 = sphi 0, %s108
      %s111 = sphi 0, %s110
      %s125 = sphi 0, %s111
      %s131 = sphi 0, %s133
      %s134 = sphi 0, %s131
      %s135 = sphi 0, %s134
      %s151 = sphi 0, %s135
    $region4: #{tpu_custom_call.1} parent=1 // loop_header_branch
      %16 = sbr.rel (%p14) target = $region8
    $region5: #{tpu_custom_call.1} parent=1 // loop_body
      %s18 = ssub.s32 %s13, 1
      %s19 = ssub.s32 %s13, 2
      %s26 = sadd.s32 1, %s21
      %p27 = scmp.ge.s32.totalorder %s26, 2
      %s28 = scalar_select %p27, 0, %s26
      %s29 = sadd.s32 1, %s20
      %s30 = scalar_select %p27, %s29, %s20
      %p31 = scmp.ge.s32.totalorder %s30, 2
      %s32 = scalar_select %p31, 0, %s30
      %s33 = ssub.s32 %s20, %s32
      %s34 = ssub.s32 %s21, %s28
      %s35 = sor.u32 %s33, %s34
      %p36 = scmp.eq.s32.totalorder %s35, 0
      %s38 = sadd.s32 %s37, 1
      %s39 = scalar_select %p36, %s37, %s38
      %p42 = pneg %p36
      %p43 = scmp.eq.s32.totalorder %s13, 3
      %p44 = por %p42, %p43
      %p45 = scmp.ne.s32.totalorder %s37, %s40
      %p46 = scmp.eq.s32.totalorder %s13, 0
      %p47 = por %p45, %p46
      %p48 = scmp.ne.s32.totalorder %s37, %s40
      %p49 = scmp.eq.s32.totalorder %s18, 3
      %p50 = por %p48, %p49
      %p51 = scmp.ne.s32.totalorder %s40, %s41
      %p52 = scmp.eq.s32.totalorder %s18, 0
      %p53 = por %p51, %p52
      %p54 = scmp.ne.s32.totalorder %s40, %s41
      %p55 = scmp.eq.s32.totalorder %s19, 3
      %p56 = por %p54, %p55
      %p58 = scmp.ne.s32.totalorder %s41, %s57
      %p59 = scmp.eq.s32.totalorder %s19, 0
      %p60 = por %p58, %p59
      %s61 = ssub.s32 %s21, %s28
      %p62 = scmp.eq.s32.totalorder %s61, 0
      %s64 = sadd.s32 %s63, 1
      %s65 = scalar_select %p62, %s63, %s64
      %p68 = pneg %p62
      %p69 = scmp.eq.s32.totalorder %s13, 3
      %p70 = por %p68, %p69
      %p71 = scmp.ne.s32.totalorder %s63, %s66
      %p72 = scmp.eq.s32.totalorder %s13, 0
      %p73 = por %p71, %p72
      %p74 = scmp.ne.s32.totalorder %s63, %s66
      %p75 = scmp.eq.s32.totalorder %s18, 3
      %p76 = por %p74, %p75
      %p77 = scmp.ne.s32.totalorder %s66, %s67
      %p78 = scmp.eq.s32.totalorder %s18, 0
      %p79 = por %p77, %p78
      %p80 = scmp.ne.s32.totalorder %s66, %s67
      %p81 = scmp.eq.s32.totalorder %s19, 3
      %p82 = por %p80, %p81
      %p84 = scmp.ne.s32.totalorder %s67, %s83
      %p85 = scmp.eq.s32.totalorder %s19, 0
      %p86 = por %p84, %p85
      %s88 = sadd.s32 %s87, 1
      %p91 = scmp.eq.s32.totalorder %s13, 3
      %p92 = scmp.ne.s32.totalorder %s87, %s89
      %p93 = scmp.eq.s32.totalorder %s13, 0
      %p94 = por %p92, %p93
      %p95 = scmp.ne.s32.totalorder %s87, %s89
      %p96 = scmp.eq.s32.totalorder %s18, 3
      %p97 = por %p95, %p96
      %p98 = scmp.ne.s32.totalorder %s89, %s90
      %p99 = scmp.eq.s32.totalorder %s18, 0
      %p100 = por %p98, %p99
      %p101 = scmp.ne.s32.totalorder %s89, %s90
      %p102 = scmp.eq.s32.totalorder %s19, 3
      %p103 = por %p101, %p102
      %p105 = scmp.ne.s32.totalorder %s90, %s104
      %p106 = scmp.eq.s32.totalorder %s19, 0
      %p107 = por %p105, %p106
      %s109 = sadd.s32 %s108, 1
      %p112 = scmp.eq.s32.totalorder %s13, 3
      %p113 = scmp.ne.s32.totalorder %s108, %s110
      %p114 = scmp.eq.s32.totalorder %s13, 0
      %p115 = por %p113, %p114
      %p116 = scmp.ne.s32.totalorder %s108, %s110
      %p117 = scmp.eq.s32.totalorder %s18, 3
      %p118 = por %p116, %p117
      %p119 = scmp.ne.s32.totalorder %s110, %s111
      %p120 = scmp.eq.s32.totalorder %s18, 0
      %p121 = por %p119, %p120
      %p122 = scmp.ne.s32.totalorder %s110, %s111
      %p123 = scmp.eq.s32.totalorder %s19, 3
      %p124 = por %p122, %p123
      %p126 = scmp.ne.s32.totalorder %s111, %s125
      %p127 = scmp.eq.s32.totalorder %s19, 0
      %p128 = por %p126, %p127
      %s129 = ssub.s32 %s20, %s32
      %p130 = scmp.eq.s32.totalorder %s129, 0
      %s132 = sadd.s32 %s131, 1
      %s133 = scalar_select %p130, %s131, %s132
      %p136 = pneg %p130
      %p137 = scmp.eq.s32.totalorder %s13, 3
      %p138 = por %p136, %p137
      %p139 = scmp.ne.s32.totalorder %s131, %s134
      %p140 = scmp.eq.s32.totalorder %s13, 0
      %p141 = por %p139, %p140
      %p142 = scmp.ne.s32.totalorder %s131, %s134
      %p143 = scmp.eq.s32.totalorder %s18, 3
      %p144 = por %p142, %p143
      %p145 = scmp.ne.s32.totalorder %s134, %s135
      %p146 = scmp.eq.s32.totalorder %s18, 0
      %p147 = por %p145, %p146
      %p148 = scmp.ne.s32.totalorder %s134, %s135
      %p149 = scmp.eq.s32.totalorder %s19, 3
      %p150 = por %p148, %p149
      %p152 = scmp.ne.s32.totalorder %s135, %s151
      %p153 = scmp.eq.s32.totalorder %s19, 0
      %p154 = por %p152, %p153
      %p155 = scmp.le.s32.totalorder 1, %s13
      %p156 = scmp.lt.s32.totalorder %s13, 5
      %p157 = pnand %p155, %p156
      %p158 = pneg %p157
      // Predicated region
      $region9: #{tpu_custom_call.1} parent=5 // pred_check
        _
      $region10: #{tpu_custom_call.1} parent=5 // pred_check_branch
        %160 = sbr.rel (%p157) target = $region12
      $region11: #{tpu_custom_call.1} parent=5 // pred_region
        %s161 = ssub.s32 %s13, 1
        // Predicated region
        $region13: #{tpu_custom_call.1} parent=11 // pred_check
          %p162 = pneg %p100
        $region14: #{tpu_custom_call.1} parent=11 // pred_check_branch
          %164 = sbr.rel (%p162) target = $region16
        $region15: #{tpu_custom_call.1} parent=11 // pred_region
          _
        $region16: #{tpu_custom_call.1} parent=11 // pred_fallthru
          _
        // Predicated region
        $region17: #{tpu_custom_call.1} parent=11 // pred_check
          %p165 = pneg %p121
        $region18: #{tpu_custom_call.1} parent=11 // pred_check_branch
          %167 = sbr.rel (%p165) target = $region20
        $region19: #{tpu_custom_call.1} parent=11 // pred_region
          _
        $region20: #{tpu_custom_call.1} parent=11 // pred_fallthru
          _
      $region12: #{tpu_custom_call.1} parent=5 // pred_fallthru
        _
      %p168 = scmp.lt.s32.totalorder %s13, 4
      // Predicated region
      $region21: #{tpu_custom_call.1} parent=5 // pred_check
        %p169 = pneg %p168
      $region22: #{tpu_custom_call.1} parent=5 // pred_check_branch
        %171 = sbr.rel (%p169) target = $region24
      $region23: #{tpu_custom_call.1} parent=5 // pred_region
        // Predicated region
        $region25: #{tpu_custom_call.1} parent=23 // pred_check
          %p172 = pneg %p47
        $region26: #{tpu_custom_call.1} parent=23 // pred_check_branch
          %174 = sbr.rel (%p172) target = $region28
        $region27: #{tpu_custom_call.1} parent=23 // pred_region
          %s175 = sand.u32 %s37, 1
          %s176 = scalar_lea.sflag [#allocation4], %s175
          %s177 = sand.u32 %s37, 1
          %s178 = smul.addr %s177, 128
          %s179 = scalar_lea.vmem [#allocation3], %s178
          %s180 = smul.u32 16, %s20
          %s182 = ssub.s32 2048, 2048
          %183 = vsyncadd %s176, %s182
          %s184 = smul.addr %s180, 2
          %s185 = sadd.s32 %s21, %s184
          %s186 = smul.addr %s185, 128
          %s187 = scalar_lea.hbm %s0, %s186
          %s188 = sshll.u32 %s179, 4
          %s189 = int_to_ptr.vmem [resolvable:$true] %s188
          %194 = dma.hbm_to_vmem [thread:$0]  %s187, 2048, %s189, %s176, 256, 128, 8
        $region28: #{tpu_custom_call.1} parent=23 // pred_fallthru
          _
        // Predicated region
        $region29: #{tpu_custom_call.1} parent=23 // pred_check
          %p195 = pneg %p73
        $region30: #{tpu_custom_call.1} parent=23 // pred_check_branch
          %197 = sbr.rel (%p195) target = $region32
        $region31: #{tpu_custom_call.1} parent=23 // pred_region
          %s198 = smul.u32 16, %s21
          %p199 = scmp.lt.s32.totalorder %s198, 31
          %s200 = scalar_select %p199, %s198, 31
          %s201 = smul.addr %s200, 8
          %s202 = scalar_lea.vmem %s1, %s201
          %s203 = smul.u32 16, %s21
        $region32: #{tpu_custom_call.1} parent=23 // pred_fallthru
          _
      $region24: #{tpu_custom_call.1} parent=5 // pred_fallthru
        _
      %p204 = scmp.le.s32.totalorder 1, %s13
      %p205 = scmp.lt.s32.totalorder %s13, 5
      %p206 = pnand %p204, %p205
      %p207 = pneg %p206
      // Predicated region
      $region33: #{tpu_custom_call.1} parent=5 // pred_check
        _
      $region34: #{tpu_custom_call.1} parent=5 // pred_check_branch
        %209 = sbr.rel (%p206) target = $region36
      $region35: #{tpu_custom_call.1} parent=5 // pred_region
        %s210 = ssub.s32 %s13, 1
        %s211 = sand.u32 %s40, 1
        %s212 = scalar_lea.sflag [#allocation4], %s211
        %s213 = sand.u32 %s40, 1
        %s214 = smul.addr %s213, 128
        %s215 = scalar_lea.vmem [#allocation3], %s214
        // Predicated region
        $region37: #{tpu_custom_call.1} parent=35 // pred_check
          %p216 = pneg %p53
        $region38: #{tpu_custom_call.1} parent=35 // pred_check_branch
          %218 = sbr.rel (%p216) target = $region40
        $region39: #{tpu_custom_call.1} parent=35 // pred_region
          %219 = dma.done %s212, 2048
        $region40: #{tpu_custom_call.1} parent=35 // pred_fallthru
          _
        %s220 = sand.u32 %s40, 1
        %s221 = scalar_lea.sflag [#allocation4], %s220
        %s222 = sand.u32 %s40, 1
        %s223 = smul.addr %s222, 128
        %s224 = scalar_lea.vmem [#allocation3], %s223
        %p225 = pneg %p53
        %p226 = pneg %p50
        %s227 = smul.u32 16, %s23
        %p228 = scmp.lt.s32.totalorder %s227, 31
        %s229 = scalar_select %p228, %s227, 31
        %s230 = smul.addr %s229, 8
        %s231 = scalar_lea.vmem %s1, %s230
        %p232 = pneg %p79
        %p233 = pneg %p76
        %p234 = pneg %p100
        %p235 = pneg %p97
        %p236 = pneg %p121
        %p237 = pneg %p118
        %p238 = pneg %p147
        %p239 = pneg %p144
        %s240 = smul.u32 16, %s22
        %p241 = scmp.lt.s32.totalorder %s240, 31
        %s242 = scalar_select %p241, %s240, 31
        %s243 = smul.addr %s242, 8
        %s244 = scalar_lea.vmem %s4, %s243
        %s245 = smul.u32 16, %s22
        %s246 = smul.u32 16, %s23
        %p247 = scmp.lt.s32.totalorder %s246, 31
        %s248 = scalar_select %p247, %s246, 31
        %s249 = smul.addr %s248, 8
        %s250 = scalar_lea.vmem %s1, %s249
        %s251 = smul.u32 16, %s23
        %s252 = smul.u32 16, %s22
        %p253 = scmp.lt.s32.totalorder %s252, 31
        %s254 = scalar_select %p253, %s252, 31
        %s255 = smul.addr %s254, 8
        %s256 = scalar_lea.vmem %s4, %s255
        %s257 = smul.u32 16, %s22
        %p258 = scmp.eq.s32.totalorder %s23, 0
        // Predicated region
        $region41: #{tpu_custom_call.1} parent=35 // pred_check
          %p259 = pneg %p258
        $region42: #{tpu_custom_call.1} parent=35 // pred_check_branch
          %261 = sbr.rel (%p259) target = $region44
        $region43: #{tpu_custom_call.1} parent=35 // pred_region
          %vm262 = vcmask 523264
          %263 = vst.msk [vmem:[#allocation2] sm:$0xff] %vm262, 0.0
          %264 = vst.msk [vmem:[#allocation2 + $0x8] sm:$0xff] %vm262, 0.0
          %265 = vst.msk [vmem:[#allocation2 + $0x10] sm:$0xff] %vm262, 0.0
          %266 = vst.msk [vmem:[#allocation2 + $0x18] sm:$0xff] %vm262, 0.0
          %267 = vst.msk [vmem:[#allocation2 + $0x20] sm:$0xff] %vm262, 0.0
          %268 = vst.msk [vmem:[#allocation2 + $0x28] sm:$0xff] %vm262, 0.0
          %269 = vst.msk [vmem:[#allocation2 + $0x30] sm:$0xff] %vm262, 0.0
          %270 = vst.msk [vmem:[#allocation2 + $0x38] sm:$0xff] %vm262, 0.0
          %271 = vst.msk [vmem:[#allocation2 + $0x40] sm:$0xff] %vm262, 0.0
          %272 = vst.msk [vmem:[#allocation2 + $0x48] sm:$0xff] %vm262, 0.0
          %273 = vst.msk [vmem:[#allocation2 + $0x50] sm:$0xff] %vm262, 0.0
          %274 = vst.msk [vmem:[#allocation2 + $0x58] sm:$0xff] %vm262, 0.0
          %275 = vst.msk [vmem:[#allocation2 + $0x60] sm:$0xff] %vm262, 0.0
          %276 = vst.msk [vmem:[#allocation2 + $0x68] sm:$0xff] %vm262, 0.0
          %277 = vst.msk [vmem:[#allocation2 + $0x70] sm:$0xff] %vm262, 0.0
          %278 = vst.msk [vmem:[#allocation2 + $0x78] sm:$0xff] %vm262, 0.0
        $region44: #{tpu_custom_call.1} parent=35 // pred_fallthru
          _
        %v279 = vld [vmem:[#allocation2] sm:$0xff]
        %v280 = vld [vmem:[#allocation2 + $0x8] sm:$0xff]
        %v281 = vld [vmem:[#allocation2 + $0x10] sm:$0xff]
        %v282 = vld [vmem:[#allocation2 + $0x18] sm:$0xff]
        %v283 = vld [vmem:[#allocation2 + $0x20] sm:$0xff]
        %v284 = vld [vmem:[#allocation2 + $0x28] sm:$0xff]
        %v285 = vld [vmem:[#allocation2 + $0x30] sm:$0xff]
        %v286 = vld [vmem:[#allocation2 + $0x38] sm:$0xff]
        %v287 = vld [vmem:[#allocation2 + $0x40] sm:$0xff]
        %v288 = vld [vmem:[#allocation2 + $0x48] sm:$0xff]
        %v289 = vld [vmem:[#allocation2 + $0x50] sm:$0xff]
        %v290 = vld [vmem:[#allocation2 + $0x58] sm:$0xff]
        %v291 = vld [vmem:[#allocation2 + $0x60] sm:$0xff]
        %v292 = vld [vmem:[#allocation2 + $0x68] sm:$0xff]
        %v293 = vld [vmem:[#allocation2 + $0x70] sm:$0xff]
        %v294 = vld [vmem:[#allocation2 + $0x78] sm:$0xff]
        %v295 = vld [vmem:[%s215] sm:$0xff]
        %v296 = vld [vmem:[%s215 + $0x8] sm:$0xff]
        %v297 = vld [vmem:[%s215 + $0x10] sm:$0xff]
        %v298 = vld [vmem:[%s215 + $0x18] sm:$0xff]
        %v299 = vld [vmem:[%s215 + $0x20] sm:$0xff]
        %v300 = vld [vmem:[%s215 + $0x28] sm:$0xff]
        %v301 = vld [vmem:[%s215 + $0x30] sm:$0xff]
        %v302 = vld [vmem:[%s215 + $0x38] sm:$0xff]
        %v303 = vld [vmem:[%s215 + $0x40] sm:$0xff]
        %v304 = vld [vmem:[%s215 + $0x48] sm:$0xff]
        %v305 = vld [vmem:[%s215 + $0x50] sm:$0xff]
        %v306 = vld [vmem:[%s215 + $0x58] sm:$0xff]
        %v307 = vld [vmem:[%s215 + $0x60] sm:$0xff]
        %v308 = vld [vmem:[%s215 + $0x68] sm:$0xff]
        %v309 = vld [vmem:[%s215 + $0x70] sm:$0xff]
        %v310 = vld [vmem:[%s215 + $0x78] sm:$0xff]
        %v311 = vld [vmem:[%s250] sm:$0xff]
        %v312 = vld [vmem:[%s250 + $0x8] sm:$0xff]
        %v313 = vld [vmem:[%s250 + $0x10] sm:$0xff]
        %v314 = vld [vmem:[%s250 + $0x18] sm:$0xff]
        %v315 = vld [vmem:[%s250 + $0x20] sm:$0xff]
        %v316 = vld [vmem:[%s250 + $0x28] sm:$0xff]
        %v317 = vld [vmem:[%s250 + $0x30] sm:$0xff]
        %v318 = vld [vmem:[%s250 + $0x38] sm:$0xff]
        %v319 = vld [vmem:[%s250 + $0x40] sm:$0xff]
        %v320 = vld [vmem:[%s250 + $0x48] sm:$0xff]
        %v321 = vld [vmem:[%s250 + $0x50] sm:$0xff]
        %v322 = vld [vmem:[%s250 + $0x58] sm:$0xff]
        %v323 = vld [vmem:[%s250 + $0x60] sm:$0xff]
        %v324 = vld [vmem:[%s250 + $0x68] sm:$0xff]
        %v325 = vld [vmem:[%s250 + $0x70] sm:$0xff]
        %v326 = vld [vmem:[%s250 + $0x78] sm:$0xff]
        %327 = vmatprep.subr.mxu0 0.0
        %328 = vmatpush1.msra.mxu0 %v326
        %329 = vmatprep.subr.mxu0 0.0
        %330 = vmatpush1.msra.mxu0 %v325
        %331 = vmatprep.subr.mxu0 0.0
        %332 = vmatpush1.msra.mxu0 %v324
        %333 = vmatprep.subr.mxu0 0.0
        %334 = vmatpush1.msra.mxu0 %v323
        %335 = vmatprep.subr.mxu0 0.0
        %336 = vmatpush1.msra.mxu0 %v322
        %337 = vmatprep.subr.mxu0 0.0
        %338 = vmatpush1.msra.mxu0 %v321
        %339 = vmatprep.subr.mxu0 0.0
        %340 = vmatpush1.msra.mxu0 %v320
        %341 = vmatprep.subr.mxu0 0.0
        %342 = vmatpush1.msra.mxu0 %v319
        %343 = vmatprep.subr.mxu0 0.0
        %344 = vmatpush1.msra.mxu0 %v318
        %345 = vmatprep.subr.mxu0 0.0
        %346 = vmatpush1.msra.mxu0 %v317
        %347 = vmatprep.subr.mxu0 0.0
        %348 = vmatpush1.msra.mxu0 %v316
        %349 = vmatprep.subr.mxu0 0.0
        %350 = vmatpush1.msra.mxu0 %v315
        %351 = vmatprep.subr.mxu0 0.0
        %352 = vmatpush1.msra.mxu0 %v314
        %353 = vmatprep.subr.mxu0 0.0
        %354 = vmatpush1.msra.mxu0 %v313
        %355 = vmatprep.subr.mxu0 0.0
        %356 = vmatpush1.msra.mxu0 %v312
        %357 = vmatprep.subr.mxu0 0.0
        %358 = vmatpush1.msra.mxu0 %v311
        %359 = vmatprep.subr.mxu0 0.0
        %360 = vmatpush2.msra.mxu0 0.0
        %361 = vmatprep.subr.mxu0 0.0
        %362 = vmatpush2.msra.mxu0 0.0
        %363 = vmatprep.subr.mxu0 0.0
        %364 = vmatpush2.msra.mxu0 0.0
        %365 = vmatprep.subr.mxu0 0.0
        %366 = vmatpush2.msra.mxu0 0.0
        %367 = vmatprep.subr.mxu0 0.0
        %368 = vmatpush2.msra.mxu0 0.0
        %369 = vmatprep.subr.mxu0 0.0
        %370 = vmatpush2.msra.mxu0 0.0
        %371 = vmatprep.subr.mxu0 0.0
        %372 = vmatpush2.msra.mxu0 0.0
        %373 = vmatprep.subr.mxu0 0.0
        %374 = vmatpush2.msra.mxu0 0.0
        %375 = vmatprep.subr.mxu0 0.0
        %376 = vmatpush2.msra.mxu0 0.0
        %377 = vmatprep.subr.mxu0 0.0
        %378 = vmatpush2.msra.mxu0 0.0
        %379 = vmatprep.subr.mxu0 0.0
        %380 = vmatpush2.msra.mxu0 0.0
        %381 = vmatprep.subr.mxu0 0.0
        %382 = vmatpush2.msra.mxu0 0.0
        %383 = vmatprep.subr.mxu0 0.0
        %384 = vmatpush2.msra.mxu0 0.0
        %385 = vmatprep.subr.mxu0 0.0
        %386 = vmatpush2.msra.mxu0 0.0
        %387 = vmatprep.subr.mxu0 0.0
        %388 = vmatpush2.msra.mxu0 0.0
        %389 = vmatprep.subr.mxu0 0.0
        %390 = vmatpush2.msra.mxu0 0.0
        %391 = vmatprep.mubr.f32.mxu0 0.0
        %392 = vmatmul.mubr.f32.gmra.mxu0 %v295
        %v393 = vpop.f32.mrf.mxu0
        %v394 = vadd.f32 0.0, %v393
        %v395 = vpop.f32.mrf.mxu0
        %396 = vmatprep.mubr.f32.mxu0 0.0
        %397 = vmatmul.mubr.f32.gmra.mxu0 %v296
        %v398 = vpop.f32.mrf.mxu0
        %v399 = vadd.f32 0.0, %v398
        %v400 = vpop.f32.mrf.mxu0
        %401 = vmatprep.mubr.f32.mxu0 0.0
        %402 = vmatmul.mubr.f32.gmra.mxu0 %v297
        %v403 = vpop.f32.mrf.mxu0
        %v404 = vadd.f32 0.0, %v403
        %v405 = vpop.f32.mrf.mxu0
        %406 = vmatprep.mubr.f32.mxu0 0.0
        %407 = vmatmul.mubr.f32.gmra.mxu0 %v298
        %v408 = vpop.f32.mrf.mxu0
        %v409 = vadd.f32 0.0, %v408
        %v410 = vpop.f32.mrf.mxu0
        %411 = vmatprep.mubr.f32.mxu0 0.0
        %412 = vmatmul.mubr.f32.gmra.mxu0 %v299
        %v413 = vpop.f32.mrf.mxu0
        %v414 = vadd.f32 0.0, %v413
        %v415 = vpop.f32.mrf.mxu0
        %416 = vmatprep.mubr.f32.mxu0 0.0
        %417 = vmatmul.mubr.f32.gmra.mxu0 %v300
        %v418 = vpop.f32.mrf.mxu0
        %v419 = vadd.f32 0.0, %v418
        %v420 = vpop.f32.mrf.mxu0
        %421 = vmatprep.mubr.f32.mxu0 0.0
        %422 = vmatmul.mubr.f32.gmra.mxu0 %v301
        %v423 = vpop.f32.mrf.mxu0
        %v424 = vadd.f32 0.0, %v423
        %v425 = vpop.f32.mrf.mxu0
        %426 = vmatprep.mubr.f32.mxu0 0.0
        %427 = vmatmul.mubr.f32.gmra.mxu0 %v302
        %v428 = vpop.f32.mrf.mxu0
        %v429 = vadd.f32 0.0, %v428
        %v430 = vpop.f32.mrf.mxu0
        %431 = vmatprep.mubr.f32.mxu0 0.0
        %432 = vmatmul.mubr.f32.gmra.mxu0 %v303
        %v433 = vpop.f32.mrf.mxu0
        %v434 = vadd.f32 0.0, %v433
        %v435 = vpop.f32.mrf.mxu0
        %436 = vmatprep.mubr.f32.mxu0 0.0
        %437 = vmatmul.mubr.f32.gmra.mxu0 %v304
        %v438 = vpop.f32.mrf.mxu0
        %v439 = vadd.f32 0.0, %v438
        %v440 = vpop.f32.mrf.mxu0
        %441 = vmatprep.mubr.f32.mxu0 0.0
        %442 = vmatmul.mubr.f32.gmra.mxu0 %v305
        %v443 = vpop.f32.mrf.mxu0
        %v444 = vadd.f32 0.0, %v443
        %v445 = vpop.f32.mrf.mxu0
        %446 = vmatprep.mubr.f32.mxu0 0.0
        %447 = vmatmul.mubr.f32.gmra.mxu0 %v306
        %v448 = vpop.f32.mrf.mxu0
        %v449 = vadd.f32 0.0, %v448
        %v450 = vpop.f32.mrf.mxu0
        %451 = vmatprep.mubr.f32.mxu0 0.0
        %452 = vmatmul.mubr.f32.gmra.mxu0 %v307
        %v453 = vpop.f32.mrf.mxu0
        %v454 = vadd.f32 0.0, %v453
        %v455 = vpop.f32.mrf.mxu0
        %456 = vmatprep.mubr.f32.mxu0 0.0
        %457 = vmatmul.mubr.f32.gmra.mxu0 %v308
        %v458 = vpop.f32.mrf.mxu0
        %v459 = vadd.f32 0.0, %v458
        %v460 = vpop.f32.mrf.mxu0
        %461 = vmatprep.mubr.f32.mxu0 0.0
        %462 = vmatmul.mubr.f32.gmra.mxu0 %v309
        %v463 = vpop.f32.mrf.mxu0
        %v464 = vadd.f32 0.0, %v463
        %v465 = vpop.f32.mrf.mxu0
        %466 = vmatprep.mubr.f32.mxu0 0.0
        %467 = vmatmul.mubr.f32.gmra.mxu0 %v310
        %v468 = vpop.f32.mrf.mxu0
        %v469 = vadd.f32 0.0, %v468
        %v470 = vpop.f32.mrf.mxu0
        %471 = vdwg.mxu0
        %v472 = vadd.f32 %v279, %v394
        %v473 = vadd.f32 %v280, %v399
        %v474 = vadd.f32 %v281, %v404
        %v475 = vadd.f32 %v282, %v409
        %v476 = vadd.f32 %v283, %v414
        %v477 = vadd.f32 %v284, %v419
        %v478 = vadd.f32 %v285, %v424
        %v479 = vadd.f32 %v286, %v429
        %v480 = vadd.f32 %v287, %v434
        %v481 = vadd.f32 %v288, %v439
        %v482 = vadd.f32 %v289, %v444
        %v483 = vadd.f32 %v290, %v449
        %v484 = vadd.f32 %v291, %v454
        %v485 = vadd.f32 %v292, %v459
        %v486 = vadd.f32 %v293, %v464
        %v487 = vadd.f32 %v294, %v469
        %vm488 = vcmask 523264
        %489 = vst.msk [vmem:[#allocation2] sm:$0xff] %vm488, %v472
        %490 = vst.msk [vmem:[#allocation2 + $0x8] sm:$0xff] %vm488, %v473
        %491 = vst.msk [vmem:[#allocation2 + $0x10] sm:$0xff] %vm488, %v474
        %492 = vst.msk [vmem:[#allocation2 + $0x18] sm:$0xff] %vm488, %v475
        %493 = vst.msk [vmem:[#allocation2 + $0x20] sm:$0xff] %vm488, %v476
        %494 = vst.msk [vmem:[#allocation2 + $0x28] sm:$0xff] %vm488, %v477
        %495 = vst.msk [vmem:[#allocation2 + $0x30] sm:$0xff] %vm488, %v478
        %496 = vst.msk [vmem:[#allocation2 + $0x38] sm:$0xff] %vm488, %v479
        %497 = vst.msk [vmem:[#allocation2 + $0x40] sm:$0xff] %vm488, %v480
        %498 = vst.msk [vmem:[#allocation2 + $0x48] sm:$0xff] %vm488, %v481
        %499 = vst.msk [vmem:[#allocation2 + $0x50] sm:$0xff] %vm488, %v482
        %500 = vst.msk [vmem:[#allocation2 + $0x58] sm:$0xff] %vm488, %v483
        %501 = vst.msk [vmem:[#allocation2 + $0x60] sm:$0xff] %vm488, %v484
        %502 = vst.msk [vmem:[#allocation2 + $0x68] sm:$0xff] %vm488, %v485
        %503 = vst.msk [vmem:[#allocation2 + $0x70] sm:$0xff] %vm488, %v486
        %504 = vst.msk [vmem:[#allocation2 + $0x78] sm:$0xff] %vm488, %v487
        %p505 = scmp.eq.s32.totalorder %s23, 1
        // Predicated region
        $region45: #{tpu_custom_call.1} parent=35 // pred_check
          %p506 = pneg %p505
        $region46: #{tpu_custom_call.1} parent=35 // pred_check_branch
          %508 = sbr.rel (%p506) target = $region48
        $region47: #{tpu_custom_call.1} parent=35 // pred_region
          %v509 = vld [vmem:[#allocation2] sm:$0xff]
          %v510 = vld [vmem:[#allocation2 + $0x8] sm:$0xff]
          %v511 = vld [vmem:[#allocation2 + $0x10] sm:$0xff]
          %v512 = vld [vmem:[#allocation2 + $0x18] sm:$0xff]
          %v513 = vld [vmem:[#allocation2 + $0x20] sm:$0xff]
          %v514 = vld [vmem:[#allocation2 + $0x28] sm:$0xff]
          %v515 = vld [vmem:[#allocation2 + $0x30] sm:$0xff]
          %v516 = vld [vmem:[#allocation2 + $0x38] sm:$0xff]
          %v517 = vld [vmem:[#allocation2 + $0x40] sm:$0xff]
          %v518 = vld [vmem:[#allocation2 + $0x48] sm:$0xff]
          %v519 = vld [vmem:[#allocation2 + $0x50] sm:$0xff]
          %v520 = vld [vmem:[#allocation2 + $0x58] sm:$0xff]
          %v521 = vld [vmem:[#allocation2 + $0x60] sm:$0xff]
          %v522 = vld [vmem:[#allocation2 + $0x68] sm:$0xff]
          %v523 = vld [vmem:[#allocation2 + $0x70] sm:$0xff]
          %v524 = vld [vmem:[#allocation2 + $0x78] sm:$0xff]
          %v525 = vld [vmem:[%s2] sm:$0xff]
          %v526 = vld [vmem:[%s2 + $0x8] sm:$0xff]
          %v527 = vld [vmem:[%s2 + $0x10] sm:$0xff]
          %v528 = vld [vmem:[%s2 + $0x18] sm:$0xff]
          %v529 = vld [vmem:[%s2 + $0x20] sm:$0xff]
          %v530 = vld [vmem:[%s2 + $0x28] sm:$0xff]
          %v531 = vld [vmem:[%s2 + $0x30] sm:$0xff]
          %v532 = vld [vmem:[%s2 + $0x38] sm:$0xff]
          %v533 = vld [vmem:[%s3] sm:$0x1]
          %v535 = vlaneseq
          %v536 = vshrl.u32 %v535, 7
          %v537 = vsub.s32 0, %v536
          %v538 = vrot.slane %v533, %v537
          %v541 = vsel %vm488, %v509, 0
          %v544 = vsel %vm488, %v510, 0
          %v547 = vsel %vm488, %v511, 0
          %v550 = vsel %vm488, %v512, 0
          %v553 = vsel %vm488, %v513, 0
          %v556 = vsel %vm488, %v514, 0
          %v559 = vsel %vm488, %v515, 0
          %v562 = vsel %vm488, %v516, 0
          %v565 = vsel %vm488, %v517, 0
          %v568 = vsel %vm488, %v518, 0
          %v571 = vsel %vm488, %v519, 0
          %v574 = vsel %vm488, %v520, 0
          %v577 = vsel %vm488, %v521, 0
          %v580 = vsel %vm488, %v522, 0
          %v583 = vsel %vm488, %v523, 0
          %v586 = vsel %vm488, %v524, 0
          %588 = vmatprep.subr.mxu0 0.0
          %589 = vmatpush1.msra.mxu0 0.0
          %590 = vmatprep.subr.mxu0 0.0
          %591 = vmatpush1.msra.mxu0 0.0
          %592 = vmatprep.subr.mxu0 0.0
          %593 = vmatpush1.msra.mxu0 0.0
          %594 = vmatprep.subr.mxu0 0.0
          %595 = vmatpush1.msra.mxu0 0.0
          %596 = vmatprep.subr.mxu0 0.0
          %597 = vmatpush1.msra.mxu0 0.0
          %598 = vmatprep.subr.mxu0 0.0
          %599 = vmatpush1.msra.mxu0 0.0
          %600 = vmatprep.subr.mxu0 0.0
          %601 = vmatpush1.msra.mxu0 0.0
          %602 = vmatprep.subr.mxu0 0.0
          %603 = vmatpush1.msra.mxu0 0.0
          %604 = vmatprep.subr.mxu0 0.0
          %605 = vmatpush1.msra.mxu0 %v532
          %606 = vmatprep.subr.mxu0 0.0
          %607 = vmatpush1.msra.mxu0 %v531
          %608 = vmatprep.subr.mxu0 0.0
          %609 = vmatpush1.msra.mxu0 %v530
          %610 = vmatprep.subr.mxu0 0.0
          %611 = vmatpush1.msra.mxu0 %v529
          %612 = vmatprep.subr.mxu0 0.0
          %613 = vmatpush1.msra.mxu0 %v528
          %614 = vmatprep.subr.mxu0 0.0
          %615 = vmatpush1.msra.mxu0 %v527
          %616 = vmatprep.subr.mxu0 0.0
          %617 = vmatpush1.msra.mxu0 %v526
          %618 = vmatprep.subr.mxu0 0.0
          %619 = vmatpush1.msra.mxu0 %v525
          %620 = vmatprep.subr.mxu0 0.0
          %621 = vmatpush2.msra.mxu0 0.0
          %622 = vmatprep.subr.mxu0 0.0
          %623 = vmatpush2.msra.mxu0 0.0
          %624 = vmatprep.subr.mxu0 0.0
          %625 = vmatpush2.msra.mxu0 0.0
          %626 = vmatprep.subr.mxu0 0.0
          %627 = vmatpush2.msra.mxu0 0.0
          %628 = vmatprep.subr.mxu0 0.0
          %629 = vmatpush2.msra.mxu0 0.0
          %630 = vmatprep.subr.mxu0 0.0
          %631 = vmatpush2.msra.mxu0 0.0
          %632 = vmatprep.subr.mxu0 0.0
          %633 = vmatpush2.msra.mxu0 0.0
          %634 = vmatprep.subr.mxu0 0.0
          %635 = vmatpush2.msra.mxu0 0.0
          %636 = vmatprep.subr.mxu0 0.0
          %637 = vmatpush2.msra.mxu0 0.0
          %638 = vmatprep.subr.mxu0 0.0
          %639 = vmatpush2.msra.mxu0 0.0
          %640 = vmatprep.subr.mxu0 0.0
          %641 = vmatpush2.msra.mxu0 0.0
          %642 = vmatprep.subr.mxu0 0.0
          %643 = vmatpush2.msra.mxu0 0.0
          %644 = vmatprep.subr.mxu0 0.0
          %645 = vmatpush2.msra.mxu0 0.0
          %646 = vmatprep.subr.mxu0 0.0
          %647 = vmatpush2.msra.mxu0 0.0
          %648 = vmatprep.subr.mxu0 0.0
          %649 = vmatpush2.msra.mxu0 0.0
          %650 = vmatprep.subr.mxu0 0.0
          %651 = vmatpush2.msra.mxu0 0.0
          %652 = vmatprep.mubr.f32.mxu0 0.0
          %653 = vmatmul.mubr.f32.gmra.mxu0 %v541
          %v654 = vpop.f32.mrf.mxu0
          %v655 = vadd.f32 %v538, %v654
          %v656 = vpop.f32.mrf.mxu0
          %657 = vmatprep.mubr.f32.mxu0 0.0
          %658 = vmatmul.mubr.f32.gmra.mxu0 %v544
          %v659 = vpop.f32.mrf.mxu0
          %v660 = vadd.f32 %v538, %v659
          %v661 = vpop.f32.mrf.mxu0
          %662 = vmatprep.mubr.f32.mxu0 0.0
          %663 = vmatmul.mubr.f32.gmra.mxu0 %v547
          %v664 = vpop.f32.mrf.mxu0
          %v665 = vadd.f32 %v538, %v664
          %v666 = vpop.f32.mrf.mxu0
          %667 = vmatprep.mubr.f32.mxu0 0.0
          %668 = vmatmul.mubr.f32.gmra.mxu0 %v550
          %v669 = vpop.f32.mrf.mxu0
          %v670 = vadd.f32 %v538, %v669
          %v671 = vpop.f32.mrf.mxu0
          %672 = vmatprep.mubr.f32.mxu0 0.0
          %673 = vmatmul.mubr.f32.gmra.mxu0 %v553
          %v674 = vpop.f32.mrf.mxu0
          %v675 = vadd.f32 %v538, %v674
          %v676 = vpop.f32.mrf.mxu0
          %677 = vmatprep.mubr.f32.mxu0 0.0
          %678 = vmatmul.mubr.f32.gmra.mxu0 %v556
          %v679 = vpop.f32.mrf.mxu0
          %v680 = vadd.f32 %v538, %v679
          %v681 = vpop.f32.mrf.mxu0
          %682 = vmatprep.mubr.f32.mxu0 0.0
          %683 = vmatmul.mubr.f32.gmra.mxu0 %v559
          %v684 = vpop.f32.mrf.mxu0
          %v685 = vadd.f32 %v538, %v684
          %v686 = vpop.f32.mrf.mxu0
          %687 = vmatprep.mubr.f32.mxu0 0.0
          %688 = vmatmul.mubr.f32.gmra.mxu0 %v562
          %v689 = vpop.f32.mrf.mxu0
          %v690 = vadd.f32 %v538, %v689
          %v691 = vpop.f32.mrf.mxu0
          %692 = vmatprep.mubr.f32.mxu0 0.0
          %693 = vmatmul.mubr.f32.gmra.mxu0 %v565
          %v694 = vpop.f32.mrf.mxu0
          %v695 = vadd.f32 %v538, %v694
          %v696 = vpop.f32.mrf.mxu0
          %697 = vmatprep.mubr.f32.mxu0 0.0
          %698 = vmatmul.mubr.f32.gmra.mxu0 %v568
          %v699 = vpop.f32.mrf.mxu0
          %v700 = vadd.f32 %v538, %v699
          %v701 = vpop.f32.mrf.mxu0
          %702 = vmatprep.mubr.f32.mxu0 0.0
          %703 = vmatmul.mubr.f32.gmra.mxu0 %v571
          %v704 = vpop.f32.mrf.mxu0
          %v705 = vadd.f32 %v538, %v704
          %v706 = vpop.f32.mrf.mxu0
          %707 = vmatprep.mubr.f32.mxu0 0.0
          %708 = vmatmul.mubr.f32.gmra.mxu0 %v574
          %v709 = vpop.f32.mrf.mxu0
          %v710 = vadd.f32 %v538, %v709
          %v711 = vpop.f32.mrf.mxu0
          %712 = vmatprep.mubr.f32.mxu0 0.0
          %713 = vmatmul.mubr.f32.gmra.mxu0 %v577
          %v714 = vpop.f32.mrf.mxu0
          %v715 = vadd.f32 %v538, %v714
          %v716 = vpop.f32.mrf.mxu0
          %717 = vmatprep.mubr.f32.mxu0 0.0
          %718 = vmatmul.mubr.f32.gmra.mxu0 %v580
          %v719 = vpop.f32.mrf.mxu0
          %v720 = vadd.f32 %v538, %v719
          %v721 = vpop.f32.mrf.mxu0
          %722 = vmatprep.mubr.f32.mxu0 0.0
          %723 = vmatmul.mubr.f32.gmra.mxu0 %v583
          %v724 = vpop.f32.mrf.mxu0
          %v725 = vadd.f32 %v538, %v724
          %v726 = vpop.f32.mrf.mxu0
          %727 = vmatprep.mubr.f32.mxu0 0.0
          %728 = vmatmul.mubr.f32.gmra.mxu0 %v586
          %v729 = vpop.f32.mrf.mxu0
          %v730 = vadd.f32 %v538, %v729
          %v731 = vpop.f32.mrf.mxu0
          %732 = vdwg.mxu0
          %v733 = vmax.f32 %v655, 0.0
          %v734 = vmax.f32 %v660, 0.0
          %v735 = vmax.f32 %v665, 0.0
          %v736 = vmax.f32 %v670, 0.0
          %v737 = vmax.f32 %v675, 0.0
          %v738 = vmax.f32 %v680, 0.0
          %v739 = vmax.f32 %v685, 0.0
          %v740 = vmax.f32 %v690, 0.0
          %v741 = vmax.f32 %v695, 0.0
          %v742 = vmax.f32 %v700, 0.0
          %v743 = vmax.f32 %v705, 0.0
          %v744 = vmax.f32 %v710, 0.0
          %v745 = vmax.f32 %v715, 0.0
          %v746 = vmax.f32 %v720, 0.0
          %v747 = vmax.f32 %v725, 0.0
          %v748 = vmax.f32 %v730, 0.0
          %749 = vst.msk [vmem:[%s256] sm:$0xff] %vm488, %v733
          %750 = vst.msk [vmem:[%s256 + $0x8] sm:$0xff] %vm488, %v734
          %751 = vst.msk [vmem:[%s256 + $0x10] sm:$0xff] %vm488, %v735
          %752 = vst.msk [vmem:[%s256 + $0x18] sm:$0xff] %vm488, %v736
          %753 = vst.msk [vmem:[%s256 + $0x20] sm:$0xff] %vm488, %v737
          %754 = vst.msk [vmem:[%s256 + $0x28] sm:$0xff] %vm488, %v738
          %755 = vst.msk [vmem:[%s256 + $0x30] sm:$0xff] %vm488, %v739
          %756 = vst.msk [vmem:[%s256 + $0x38] sm:$0xff] %vm488, %v740
          %757 = vst.msk [vmem:[%s256 + $0x40] sm:$0xff] %vm488, %v741
          %758 = vst.msk [vmem:[%s256 + $0x48] sm:$0xff] %vm488, %v742
          %759 = vst.msk [vmem:[%s256 + $0x50] sm:$0xff] %vm488, %v743
          %760 = vst.msk [vmem:[%s256 + $0x58] sm:$0xff] %vm488, %v744
          %761 = vst.msk [vmem:[%s256 + $0x60] sm:$0xff] %vm488, %v745
          %762 = vst.msk [vmem:[%s256 + $0x68] sm:$0xff] %vm488, %v746
          %763 = vst.msk [vmem:[%s256 + $0x70] sm:$0xff] %vm488, %v747
          %764 = vst.msk [vmem:[%s256 + $0x78] sm:$0xff] %vm488, %v748
        $region48: #{tpu_custom_call.1} parent=35 // pred_fallthru
          _
        %s765 = smul.u32 16, %s22
        %p766 = scmp.lt.s32.totalorder %s765, 31
        %s767 = scalar_select %p766, %s765, 31
        %s768 = smul.addr %s767, 8
        %s769 = scalar_lea.vmem %s4, %s768
        // Predicated region
        $region49: #{tpu_custom_call.1} parent=35 // pred_check
          %p770 = pneg %p144
        $region50: #{tpu_custom_call.1} parent=35 // pred_check_branch
          %772 = sbr.rel (%p770) target = $region52
        $region51: #{tpu_custom_call.1} parent=35 // pred_region
          %s773 = smul.u32 16, %s22
        $region52: #{tpu_custom_call.1} parent=35 // pred_fallthru
          _
      $region36: #{tpu_custom_call.1} parent=5 // pred_fallthru
        _
      %p774 = scmp.le.s32.totalorder 2, %s13
      // Predicated region
      $region53: #{tpu_custom_call.1} parent=5 // pred_check
        %p775 = pneg %p774
      $region54: #{tpu_custom_call.1} parent=5 // pred_check_branch
        %777 = sbr.rel (%p775) target = $region56
      $region55: #{tpu_custom_call.1} parent=5 // pred_region
        %s778 = ssub.s32 %s13, 2
        // Predicated region
        $region57: #{tpu_custom_call.1} parent=55 // pred_check
          %p779 = pneg %p150
        $region58: #{tpu_custom_call.1} parent=55 // pred_check_branch
          %781 = sbr.rel (%p779) target = $region60
        $region59: #{tpu_custom_call.1} parent=55 // pred_region
          %s782 = smul.u32 16, %s24
          %p783 = scmp.lt.s32.totalorder %s782, 31
          %s784 = scalar_select %p783, %s782, 31
          %s785 = smul.addr %s784, 8
          %s786 = scalar_lea.vmem %s4, %s785
        $region60: #{tpu_custom_call.1} parent=55 // pred_fallthru
          _
      $region56: #{tpu_custom_call.1} parent=5 // pred_fallthru
        _
    $region6: #{tpu_custom_call.1} parent=1 // loop_footer
      %s17 = sadd.s32 1, %s13
    $region7: #{tpu_custom_call.1} parent=1 // loop_footer_branch
      %12 = sbr.rel target = $region3
    $region8: #{tpu_custom_call.1} parent=1 // loop_exit
      _
    %787 = vsyncpa [#allocation4], 1
    %s788 = scalar_lea.sflag [#allocation4], 1
    %789 = vsyncpa %s788, 1

</llo_original>
